<compile_context>
chip_gen: v5e
topology: v5e:2x2
jax: 0.10.0
libtpu: 0.0.40
codegen_flags: <defaults>
</compile_context>

<pallas_src>
import jax
import jax.numpy as jnp
from jax.experimental import pallas as pl
from jax.experimental.pallas import tpu as pltpu

LANE = 128  # TPU lane width


def policy_kernel(x_ref, w1_ref, b1_ref, w2_ref, b2_ref, o_ref):
    # fc1: (block_b, In)bf16 @ (In, H_pad)bf16 -> f32 accumulate; bias+ReLU in f32.
    h = jnp.dot(x_ref[...], w1_ref[...], preferred_element_type=jnp.float32)
    h = jnp.maximum(h + b1_ref[...], 0.0)

    # fc2: (block_b, H_pad)bf16 @ (H_pad, A_pad)bf16 -> f32 accumulate.
    logits = jnp.dot(h.astype(jnp.bfloat16), w2_ref[...],
                     preferred_element_type=jnp.float32)
    logits = logits + b2_ref[...]        # padded action cols biased to -1e30

    # Numerically-stable softmax over the (padded) action axis.  Exact divide:
    # rows must sum to 1; A is tiny so the extra VPU divide is free relative to
    # the HBM-bound load/store path.
    m = jnp.max(logits, axis=-1, keepdims=True)
    e = jnp.exp(logits - m)
    denom = jnp.sum(e, axis=-1, keepdims=True)
    probs = e / denom

    # Store only the real action columns (narrow, masked store) -> ~32x less
    # output HBM traffic than a 128-lane padded slab.
    o_ref[...] = probs[:, :o_ref.shape[-1]].astype(o_ref.dtype)


def _round_up(n, m):
    return ((n + m - 1) // m) * m


def _choose_block_b(batch):
    """Batch tile: as large as useful (up to 1024 rows) for HBM efficiency,
    but keep >= 2 grid steps once B exceeds one tile so v7x's two TensorCores
    both get work under dimension_semantics=("parallel",)."""
    b8 = _round_up(batch, 8)
    if b8 <= 128:
        return b8                          # single small tile (full-dim block)
    half = _round_up(pl.cdiv(b8, 2), 128)  # >= 2 steps, 128-row grain
    return min(1024, half)


def prepare_params(w1, b1, w2, b2):
    """One-time padding + bf16 cast of the parameters (hoisted out of the
    per-call forward).  w1: (In, H), b1: (H,), w2: (H, A), b2: (A,)."""
    In, H = w1.shape
    A = w2.shape[1]
    H_pad = _round_up(H, LANE)
    A_pad = _round_up(A, LANE)

    w1_p = jnp.zeros((In, H_pad), jnp.bfloat16).at[:, :H].set(w1.astype(jnp.bfloat16))
    b1_p = jnp.zeros((1, H_pad), jnp.float32).at[:, :H].set(b1)
    # Padded w2 rows/cols are exactly zero, so padded-lane logits are exactly
    # the -1e30 bias -> exp underflows to 0 mass.  Do NOT change the zero
    # padding of w2 or move logits to bf16 without revisiting this.
    w2_p = jnp.zeros((H_pad, A_pad), jnp.bfloat16).at[:H, :A].set(w2.astype(jnp.bfloat16))
    b2_p = jnp.full((1, A_pad), -1e30, jnp.float32).at[:, :A].set(b2)
    return w1_p, b1_p, w2_p, b2_p


def policy_forward(x, w1_p, b1_p, w2_p, b2_p, num_actions):
    """x: (B, In) f32.  Padded/bf16 params come from prepare_params()."""
    B, In = x.shape
    H_pad = w1_p.shape[1]
    A_pad = w2_p.shape[1]
    A = num_actions

    block_b = _choose_block_b(B)
    n_blocks = pl.cdiv(B, block_b)
    B_pad = n_blocks * block_b

    xb = x.astype(jnp.bfloat16)
    if B_pad != B:
        # Only in the ragged case do we touch x again (tail-only zero pad).
        xb = jnp.pad(xb, ((0, B_pad - B), (0, 0)))

    cost = pl.CostEstimate(
        flops=2 * B_pad * (In * H_pad + H_pad * A_pad),
        transcendentals=B_pad * A_pad,
        bytes_accessed=(2 * (B_pad * In + In * H_pad + H_pad * A_pad)  # bf16 reads
                        + 4 * (H_pad + A_pad)                          # f32 biases
                        + 4 * B_pad * A),                              # f32 narrow out
    )

    out = pl.pallas_call(
        policy_kernel,
        out_shape=jax.ShapeDtypeStruct((B_pad, A), jnp.float32),
        grid_spec=pltpu.PrefetchScalarGridSpec(
            num_scalar_prefetch=0,
            grid=(n_blocks,),
            in_specs=[
                pl.BlockSpec((block_b, In), lambda i: (i, 0)),   # x: tiled over batch
                pl.BlockSpec((In, H_pad), lambda i: (0, 0)),     # w1: resident
                pl.BlockSpec((1, H_pad), lambda i: (0, 0)),      # b1: resident
                pl.BlockSpec((H_pad, A_pad), lambda i: (0, 0)),  # w2: resident
                pl.BlockSpec((1, A_pad), lambda i: (0, 0)),      # b2: resident
            ],
            # Last dim A equals the full array dim -> legal under the (8,128)
            # rule; trades masked stores for ~32x fewer writeback bytes.
            out_specs=pl.BlockSpec((block_b, A), lambda i: (i, 0)),
        ),
        compiler_params=pltpu.CompilerParams(
            dimension_semantics=("parallel",),   # batch tiles are independent
        ),
        cost_estimate=cost,
    )(xb, w1_p, b1_p, w2_p, b2_p)

    return out[:B] if B_pad != B else out


def init_linear_params(key, in_features, out_features):
    """Deterministic init mimicking PyTorch nn.Linear defaults (uniform ±1/sqrt(in)).
    Stored transposed: (in, out)."""
    kw, kb = jax.random.split(key)
    bound = 1.0 / jnp.sqrt(jnp.float32(in_features))
    w = jax.random.uniform(kw, (in_features, out_features), jnp.float32,
                           minval=-bound, maxval=bound)
    b = jax.random.uniform(kb, (out_features,), jnp.float32,
                           minval=-bound, maxval=bound)
    return w, b


if __name__ == "__main__":
    # Small-but-representative shapes: 2 batch tiles of 128 rows exercise the
    # multi-step grid; hidden/action sizes match a Pong-style policy net.
    batch = 256
    input_size = 128
    hidden_size = 32
    action_size = 4

    key = jax.random.PRNGKey(0)
    kx, k1, k2 = jax.random.split(key, 3)

    x = jax.random.normal(kx, (batch, input_size), jnp.float32)
    w1, b1 = init_linear_params(k1, input_size, hidden_size)
    w2, b2 = init_linear_params(k2, hidden_size, action_size)

    # One-time parameter preparation (padding + bf16 cast), hoisted out of forward.
    w1_p, b1_p, w2_p, b2_p = prepare_params(w1, b1, w2, b2)

    out = policy_forward(x, w1_p, b1_p, w2_p, b2_p, action_size)
    out = jax.block_until_ready(out)

    # Reference: identical math on the same bf16-rounded operands, f32 accumulate,
    # exact softmax (matches the PyTorch forward semantics).
    xb = x.astype(jnp.bfloat16).astype(jnp.float32)
    w1b = w1.astype(jnp.bfloat16).astype(jnp.float32)
    w2b = w2.astype(jnp.bfloat16).astype(jnp.float32)
    h_ref = jnp.maximum(xb @ w1b + b1, 0.0)
    logits_ref = h_ref.astype(jnp.bfloat16).astype(jnp.float32) @ w2b + b2
    ref = jax.nn.softmax(logits_ref, axis=-1)

    assert out.shape == (batch, action_size)
    max_err = float(jnp.max(jnp.abs(out - ref)))
    assert max_err < 2e-3, max_err
    # Exact divide => rows sum to 1 within f32 rounding.
    assert bool(jnp.allclose(jnp.sum(out, axis=-1), 1.0, atol=1e-5))
    assert bool(jnp.all(out >= 0.0))

    print("KERNEL_OK")
</pallas_src>

<mosaic_0001>
module attributes {stable_mosaic.version = 11 : i64} {
  func.func @policy_kernel(%arg0: i32, %arg1: memref<128x128xbf16, #tpu.memory_space<vmem>>, %arg2: memref<128x128xbf16, #tpu.memory_space<vmem>>, %arg3: memref<1x128xf32, #tpu.memory_space<vmem>>, %arg4: memref<128x128xbf16, #tpu.memory_space<vmem>>, %arg5: memref<1x128xf32, #tpu.memory_space<vmem>>, %arg6: memref<128x4xf32, #tpu.memory_space<vmem>>) attributes {dimension_semantics = [#tpu.dimension_semantics<parallel>], iteration_bounds = array<i64: 2>, scalar_prefetch = 0 : i64, scratch_operands = 0 : i64, tpu.core_type = #tpu.core_type<tc>, window_params = [{transform_indices = @transform_0, window_bounds = array<i64: 128, 128>}, {pipeline_mode = #tpu.pipeline_mode<synchronous>, transform_indices = @transform_1, window_bounds = array<i64: 128, 128>}, {pipeline_mode = #tpu.pipeline_mode<synchronous>, transform_indices = @transform_2, window_bounds = array<i64: 1, 128>}, {pipeline_mode = #tpu.pipeline_mode<synchronous>, transform_indices = @transform_3, window_bounds = array<i64: 128, 128>}, {pipeline_mode = #tpu.pipeline_mode<synchronous>, transform_indices = @transform_4, window_bounds = array<i64: 1, 128>}, {transform_indices = @transform_5, window_bounds = array<i64: 128, 4>}]} {
    %c0 = arith.constant 0 : index
    %c0_0 = arith.constant 0 : index
    %0 = vector.load %arg1[%c0, %c0_0] : memref<128x128xbf16, #tpu.memory_space<vmem>>, vector<128x128xbf16>
    %c0_1 = arith.constant 0 : index
    %c0_2 = arith.constant 0 : index
    %1 = vector.load %arg2[%c0_1, %c0_2] : memref<128x128xbf16, #tpu.memory_space<vmem>>, vector<128x128xbf16>
    %cst = arith.constant dense<0.000000e+00> : vector<128x128xf32>
    %2 = tpu.matmul %0, %1, %cst {dimension_numbers = #tpu.dot_dimension_numbers<[1], [0], [0], [1], [0, 0, 1, 1], [], []>} : vector<128x128xbf16>, vector<128x128xbf16>, vector<128x128xf32> -> vector<128x128xf32>
    %c0_3 = arith.constant 0 : index
    %c0_4 = arith.constant 0 : index
    %3 = vector.load %arg3[%c0_3, %c0_4] : memref<1x128xf32, #tpu.memory_space<vmem>>, vector<1x128xf32>
    %4 = vector.broadcast %3 : vector<1x128xf32> to vector<128x128xf32>
    %5 = arith.addf %2, %4 : vector<128x128xf32>
    %cst_5 = arith.constant 0.000000e+00 : f32
    %6 = vector.broadcast %cst_5 : f32 to vector<128x128xf32>
    %7 = arith.maximumf %5, %6 : vector<128x128xf32>
    %8 = arith.truncf %7 : vector<128x128xf32> to vector<128x128xbf16>
    %c0_6 = arith.constant 0 : index
    %c0_7 = arith.constant 0 : index
    %9 = vector.load %arg4[%c0_6, %c0_7] : memref<128x128xbf16, #tpu.memory_space<vmem>>, vector<128x128xbf16>
    %cst_8 = arith.constant dense<0.000000e+00> : vector<128x128xf32>
    %10 = tpu.matmul %8, %9, %cst_8 {dimension_numbers = #tpu.dot_dimension_numbers<[1], [0], [0], [1], [0, 0, 1, 1], [], []>} : vector<128x128xbf16>, vector<128x128xbf16>, vector<128x128xf32> -> vector<128x128xf32>
    %c0_9 = arith.constant 0 : index
    %c0_10 = arith.constant 0 : index
    %11 = vector.load %arg5[%c0_9, %c0_10] : memref<1x128xf32, #tpu.memory_space<vmem>>, vector<1x128xf32>
    %12 = vector.broadcast %11 : vector<1x128xf32> to vector<128x128xf32>
    %13 = arith.addf %10, %12 : vector<128x128xf32>
    %cst_11 = arith.constant dense<0xFF800000> : vector<128xf32>
    %14 = vector.multi_reduction <maximumf>, %13, %cst_11 [1] : vector<128x128xf32> to vector<128xf32>
    %15 = vector.shape_cast %14 : vector<128xf32> to vector<128x1xf32>
    %16 = vector.broadcast %15 : vector<128x1xf32> to vector<128x128xf32>
    %17 = arith.subf %13, %16 : vector<128x128xf32>
    %18 = math.exp %17 : vector<128x128xf32>
    %cst_12 = arith.constant dense<0.000000e+00> : vector<128xf32>
    %19 = vector.multi_reduction <add>, %18, %cst_12 [1] : vector<128x128xf32> to vector<128xf32>
    %20 = vector.shape_cast %19 : vector<128xf32> to vector<128x1xf32>
    %21 = vector.broadcast %20 : vector<128x1xf32> to vector<128x128xf32>
    %22 = arith.divf %18, %21 : vector<128x128xf32>
    %23 = vector.extract_strided_slice %22 {offsets = [0, 0], sizes = [128, 4], strides = [1, 1]} : vector<128x128xf32> to vector<128x4xf32>
    %c0_13 = arith.constant 0 : index
    %c0_14 = arith.constant 0 : index
    %24 = vector.load %arg6[%c0_13, %c0_14] : memref<128x4xf32, #tpu.memory_space<vmem>>, vector<128x4xf32>
    tpu.vector_store %arg6[%c0_13, %c0_14], %23 {strides = array<i32>} : memref<128x4xf32, #tpu.memory_space<vmem>>, vector<128x4xf32>,
    return
  }
  func.func @transform_0(%arg0: i32) -> (i32, i32) {
    %c0_i32 = arith.constant 0 : i32
    %c0_i32_0 = arith.constant 0 : i32
    return %arg0, %c0_i32 : i32, i32
  }
  func.func @transform_1(%arg0: i32) -> (i32, i32) {
    %c0_i32 = arith.constant 0 : i32
    %c0_i32_0 = arith.constant 0 : i32
    %c0_i32_1 = arith.constant 0 : i32
    return %c0_i32, %c0_i32_0 : i32, i32
  }
  func.func @transform_2(%arg0: i32) -> (i32, i32) {
    %c0_i32 = arith.constant 0 : i32
    %c0_i32_0 = arith.constant 0 : i32
    %c0_i32_1 = arith.constant 0 : i32
    return %c0_i32, %c0_i32_0 : i32, i32
  }
  func.func @transform_3(%arg0: i32) -> (i32, i32) {
    %c0_i32 = arith.constant 0 : i32
    %c0_i32_0 = arith.constant 0 : i32
    %c0_i32_1 = arith.constant 0 : i32
    return %c0_i32, %c0_i32_0 : i32, i32
  }
  func.func @transform_4(%arg0: i32) -> (i32, i32) {
    %c0_i32 = arith.constant 0 : i32
    %c0_i32_0 = arith.constant 0 : i32
    %c0_i32_1 = arith.constant 0 : i32
    return %c0_i32, %c0_i32_0 : i32, i32
  }
  func.func @transform_5(%arg0: i32) -> (i32, i32) {
    %c0_i32 = arith.constant 0 : i32
    %c0_i32_0 = arith.constant 0 : i32
    return %arg0, %c0_i32 : i32, i32
  }
}

</mosaic_0001>

<llo_original>
// kernel: tpu_custom_call.1
$region0: #{tpu_custom_call.1}
  #allocation0 [shape = 'u32[]', space=smem, size = 0x4, offset = 0x4, fixed_abs, tag = 'smem constant byte address 0x4 - core index']
  #allocation1 [shape = 'u32[72,128]{1,0:T(1,128)}', space=vmem, size = 0x9000, scoped, tag = 'internal scratch']
  %s0 = inlined_call_operand.hbm [shape: bf16[256,128], index: 0, kind: input, shape index: {}]
  %s1 = inlined_call_operand.hbm [shape: bf16[128,128], index: 1, kind: input, shape index: {}]
  %s2 = inlined_call_operand.vmem [shape: f32[1,128], index: 2, kind: input, shape index: {}]
  %s3 = inlined_call_operand.hbm [shape: bf16[128,128], index: 3, kind: input, shape index: {}]
  %s4 = inlined_call_operand.vmem [shape: f32[1,128], index: 4, kind: input, shape index: {}]
  %s5 = inlined_call_operand.vmem [shape: f32[256,4], index: 5, kind: output, shape index: {}]
  %s6 = sld [smem:[#allocation0]]
  $region65: #{tpu_custom_call.1} parent=0
    _
  %s8 = ssub.s32 1, %s6
  %s9 = scalar_select 0, %s8, %s6
  $region1: #{tpu_custom_call.1} parent=0
    #allocation2 [shape = 'u8[65536]{0}', space=vmem, size = 0x10000, scoped, tag = 'input window, operand 0']
    #allocation3 [shape = 's32[2]{0}', space=sflag, size = 0x8, scoped, tag = 'scoped memory for tpu_custom_call.1']
    #allocation4 [shape = 'u8[32768]{0}', space=vmem, size = 0x8000, scoped, tag = 'input window, operand 1, single buffered']
    #allocation5 [shape = 's32[1]{0}', space=sflag, size = 0x4, scoped, tag = 'scoped memory for tpu_custom_call.1']
    #allocation6 [shape = 'u8[32768]{0}', space=vmem, size = 0x8000, scoped, tag = 'input window, operand 3, single buffered']
    %10 = vsyncpa [#allocation3], 0
    %s11 = scalar_lea.sflag [#allocation3], 1
    %12 = vsyncpa %s11, 0
    %13 = vsyncpa [#allocation5], 0
    loop: start=0, step=1, limit=4
    $region2: #{tpu_custom_call.1} parent=1 // loop_pre_header
      _
    $region3: #{tpu_custom_call.1} parent=1 // loop_header
      %s15 = sphi 0, %s19
      %p16 = scmp.ge.s32.totalorder %s15, 4
      %s25 = sphi 0, %s27
      %s28 = sphi 0, %s25
      %s29 = sphi 0, %s28
      %s45 = sphi 0, %s29
      %s49 = sphi 0, %s49
      %s51 = sphi 0, %s49
      %s52 = sphi 0, %s51
      %s66 = sphi 0, %s52
      %s70 = sphi 0, %s70
      %s72 = sphi 0, %s70
      %s73 = sphi 0, %s72
      %s87 = sphi 0, %s73
      %s91 = sphi 0, %s91
      %s93 = sphi 0, %s91
      %s94 = sphi 0, %s93
      %s108 = sphi 0, %s94
      %s112 = sphi 0, %s112
      %s114 = sphi 0, %s112
      %s115 = sphi 0, %s114
      %s129 = sphi 0, %s115
      %s135 = sphi 0, %s137
      %s138 = sphi 0, %s135
      %s139 = sphi 0, %s138
      %s155 = sphi 0, %s139
    $region4: #{tpu_custom_call.1} parent=1 // loop_header_branch
      %18 = sbr.rel (%p16) target = $region8
    $region5: #{tpu_custom_call.1} parent=1 // loop_body
      %s20 = ssub.s32 %s15, 1
      %s21 = ssub.s32 %s15, 2
      %s22 = sadd.s32 %s15, 1
      %s23 = ssub.s32 %s15, %s22
      %p24 = scmp.eq.s32.totalorder %s23, 0
      %s26 = sadd.s32 %s25, 1
      %s27 = scalar_select %p24, %s25, %s26
      %p30 = pneg %p24
      %p31 = scmp.eq.s32.totalorder %s15, 1
      %p32 = por %p30, %p31
      %p33 = scmp.ne.s32.totalorder %s25, %s28
      %p34 = scmp.eq.s32.totalorder %s15, 0
      %p35 = por %p33, %p34
      %p36 = scmp.ne.s32.totalorder %s25, %s28
      %p37 = scmp.eq.s32.totalorder %s20, 1
      %p38 = por %p36, %p37
      %p39 = scmp.ne.s32.totalorder %s28, %s29
      %p40 = scmp.eq.s32.totalorder %s20, 0
      %p41 = por %p39, %p40
      %p42 = scmp.ne.s32.totalorder %s28, %s29
      %p43 = scmp.eq.s32.totalorder %s21, 1
      %p44 = por %p42, %p43
      %p46 = scmp.ne.s32.totalorder %s29, %s45
      %p47 = scmp.eq.s32.totalorder %s21, 0
      %p48 = por %p46, %p47
      %s50 = sadd.s32 %s49, 1
      %p53 = scmp.eq.s32.totalorder %s15, 1
      %p54 = scmp.ne.s32.totalorder %s49, %s51
      %p55 = scmp.eq.s32.totalorder %s15, 0
      %p56 = por %p54, %p55
      %p57 = scmp.ne.s32.totalorder %s49, %s51
      %p58 = scmp.eq.s32.totalorder %s20, 1
      %p59 = por %p57, %p58
      %p60 = scmp.ne.s32.totalorder %s51, %s52
      %p61 = scmp.eq.s32.totalorder %s20, 0
      %p62 = por %p60, %p61
      %p63 = scmp.ne.s32.totalorder %s51, %s52
      %p64 = scmp.eq.s32.totalorder %s21, 1
      %p65 = por %p63, %p64
      %p67 = scmp.ne.s32.totalorder %s52, %s66
      %p68 = scmp.eq.s32.totalorder %s21, 0
      %p69 = por %p67, %p68
      %s71 = sadd.s32 %s70, 1
      %p74 = scmp.eq.s32.totalorder %s15, 1
      %p75 = scmp.ne.s32.totalorder %s70, %s72
      %p76 = scmp.eq.s32.totalorder %s15, 0
      %p77 = por %p75, %p76
      %p78 = scmp.ne.s32.totalorder %s70, %s72
      %p79 = scmp.eq.s32.totalorder %s20, 1
      %p80 = por %p78, %p79
      %p81 = scmp.ne.s32.totalorder %s72, %s73
      %p82 = scmp.eq.s32.totalorder %s20, 0
      %p83 = por %p81, %p82
      %p84 = scmp.ne.s32.totalorder %s72, %s73
      %p85 = scmp.eq.s32.totalorder %s21, 1
      %p86 = por %p84, %p85
      %p88 = scmp.ne.s32.totalorder %s73, %s87
      %p89 = scmp.eq.s32.totalorder %s21, 0
      %p90 = por %p88, %p89
      %s92 = sadd.s32 %s91, 1
      %p95 = scmp.eq.s32.totalorder %s15, 1
      %p96 = scmp.ne.s32.totalorder %s91, %s93
      %p97 = scmp.eq.s32.totalorder %s15, 0
      %p98 = por %p96, %p97
      %p99 = scmp.ne.s32.totalorder %s91, %s93
      %p100 = scmp.eq.s32.totalorder %s20, 1
      %p101 = por %p99, %p100
      %p102 = scmp.ne.s32.totalorder %s93, %s94
      %p103 = scmp.eq.s32.totalorder %s20, 0
      %p104 = por %p102, %p103
      %p105 = scmp.ne.s32.totalorder %s93, %s94
      %p106 = scmp.eq.s32.totalorder %s21, 1
      %p107 = por %p105, %p106
      %p109 = scmp.ne.s32.totalorder %s94, %s108
      %p110 = scmp.eq.s32.totalorder %s21, 0
      %p111 = por %p109, %p110
      %s113 = sadd.s32 %s112, 1
      %p116 = scmp.eq.s32.totalorder %s15, 1
      %p117 = scmp.ne.s32.totalorder %s112, %s114
      %p118 = scmp.eq.s32.totalorder %s15, 0
      %p119 = por %p117, %p118
      %p120 = scmp.ne.s32.totalorder %s112, %s114
      %p121 = scmp.eq.s32.totalorder %s20, 1
      %p122 = por %p120, %p121
      %p123 = scmp.ne.s32.totalorder %s114, %s115
      %p124 = scmp.eq.s32.totalorder %s20, 0
      %p125 = por %p123, %p124
      %p126 = scmp.ne.s32.totalorder %s114, %s115
      %p127 = scmp.eq.s32.totalorder %s21, 1
      %p128 = por %p126, %p127
      %p130 = scmp.ne.s32.totalorder %s115, %s129
      %p131 = scmp.eq.s32.totalorder %s21, 0
      %p132 = por %p130, %p131
      %s133 = ssub.s32 %s15, %s22
      %p134 = scmp.eq.s32.totalorder %s133, 0
      %s136 = sadd.s32 %s135, 1
      %s137 = scalar_select %p134, %s135, %s136
      %p140 = pneg %p134
      %p141 = scmp.eq.s32.totalorder %s15, 1
      %p142 = por %p140, %p141
      %p143 = scmp.ne.s32.totalorder %s135, %s138
      %p144 = scmp.eq.s32.totalorder %s15, 0
      %p145 = por %p143, %p144
      %p146 = scmp.ne.s32.totalorder %s135, %s138
      %p147 = scmp.eq.s32.totalorder %s20, 1
      %p148 = por %p146, %p147
      %p149 = scmp.ne.s32.totalorder %s138, %s139
      %p150 = scmp.eq.s32.totalorder %s20, 0
      %p151 = por %p149, %p150
      %p152 = scmp.ne.s32.totalorder %s138, %s139
      %p153 = scmp.eq.s32.totalorder %s21, 1
      %p154 = por %p152, %p153
      %p156 = scmp.ne.s32.totalorder %s139, %s155
      %p157 = scmp.eq.s32.totalorder %s21, 0
      %p158 = por %p156, %p157
      %p159 = scmp.le.s32.totalorder 1, %s15
      %p160 = scmp.lt.s32.totalorder %s15, 3
      %p161 = pnand %p159, %p160
      %p162 = pneg %p161
      // Predicated region
      $region9: #{tpu_custom_call.1} parent=5 // pred_check
        _
      $region10: #{tpu_custom_call.1} parent=5 // pred_check_branch
        %164 = sbr.rel (%p161) target = $region12
      $region11: #{tpu_custom_call.1} parent=5 // pred_region
        %s165 = ssub.s32 %s15, 1
        // Predicated region
        $region13: #{tpu_custom_call.1} parent=11 // pred_check
          %p166 = pneg %p62
        $region14: #{tpu_custom_call.1} parent=11 // pred_check_branch
          %168 = sbr.rel (%p166) target = $region16
        $region15: #{tpu_custom_call.1} parent=11 // pred_region
          %170 = vsyncadd [#allocation5], 0
          %s171 = sshll.u32 %s1, 4
          %s172 = int_to_ptr.hbm [resolvable:$true] %s171
          %s173 = sshll.u32 [#allocation4], 4
          %s174 = int_to_ptr.vmem [resolvable:$true] %s173
          %179 = dma.hbm_to_vmem [thread:$0]  %s172, 1024, %s174, [#allocation5], 64, 64, 4
        $region16: #{tpu_custom_call.1} parent=11 // pred_fallthru
          _
        // Predicated region
        $region17: #{tpu_custom_call.1} parent=11 // pred_check
          %p180 = pneg %p83
        $region18: #{tpu_custom_call.1} parent=11 // pred_check_branch
          %182 = sbr.rel (%p180) target = $region20
        $region19: #{tpu_custom_call.1} parent=11 // pred_region
          _
        $region20: #{tpu_custom_call.1} parent=11 // pred_fallthru
          _
        // Predicated region
        $region21: #{tpu_custom_call.1} parent=11 // pred_check
          %p183 = pneg %p104
        $region22: #{tpu_custom_call.1} parent=11 // pred_check_branch
          %185 = sbr.rel (%p183) target = $region24
        $region23: #{tpu_custom_call.1} parent=11 // pred_region
          %187 = vsyncadd [#allocation5], 0
          %s188 = sshll.u32 %s3, 4
          %s189 = int_to_ptr.hbm [resolvable:$true] %s188
          %s190 = sshll.u32 [#allocation6], 4
          %s191 = int_to_ptr.vmem [resolvable:$true] %s190
          %196 = dma.hbm_to_vmem [thread:$0]  %s189, 1024, %s191, [#allocation5], 64, 64, 4
        $region24: #{tpu_custom_call.1} parent=11 // pred_fallthru
          _
        // Predicated region
        $region25: #{tpu_custom_call.1} parent=11 // pred_check
          %p197 = pneg %p125
        $region26: #{tpu_custom_call.1} parent=11 // pred_check_branch
          %199 = sbr.rel (%p197) target = $region28
        $region27: #{tpu_custom_call.1} parent=11 // pred_region
          _
        $region28: #{tpu_custom_call.1} parent=11 // pred_fallthru
          _
      $region12: #{tpu_custom_call.1} parent=5 // pred_fallthru
        _
      %p200 = scmp.lt.s32.totalorder %s15, 2
      // Predicated region
      $region29: #{tpu_custom_call.1} parent=5 // pred_check
        %p201 = pneg %p200
      $region30: #{tpu_custom_call.1} parent=5 // pred_check_branch
        %203 = sbr.rel (%p201) target = $region32
      $region31: #{tpu_custom_call.1} parent=5 // pred_region
        // Predicated region
        $region33: #{tpu_custom_call.1} parent=31 // pred_check
          %p204 = pneg %p35
        $region34: #{tpu_custom_call.1} parent=31 // pred_check_branch
          %206 = sbr.rel (%p204) target = $region36
        $region35: #{tpu_custom_call.1} parent=31 // pred_region
          %s207 = sand.u32 %s25, 1
          %s208 = scalar_lea.sflag [#allocation3], %s207
          %s209 = sand.u32 %s25, 1
          %s210 = smul.addr %s209, 64
          %s211 = scalar_lea.vmem [#allocation2], %s210
          %s212 = smul.u32 16, %s15
          %214 = vsyncadd %s208, 0
          %s215 = smul.addr %s212, 4
          %s216 = scalar_lea.hbm %s0, %s215
          %s217 = sshll.u32 %s216, 4
          %s218 = int_to_ptr.hbm [resolvable:$true] %s217
          %s219 = sshll.u32 %s211, 4
          %s220 = int_to_ptr.vmem [resolvable:$true] %s219
          %225 = dma.hbm_to_vmem [thread:$0]  %s218, 1024, %s220, %s208, 64, 64, 4
        $region36: #{tpu_custom_call.1} parent=31 // pred_fallthru
          _
      $region32: #{tpu_custom_call.1} parent=5 // pred_fallthru
        _
      %p226 = scmp.le.s32.totalorder 1, %s15
      %p227 = scmp.lt.s32.totalorder %s15, 3
      %p228 = pnand %p226, %p227
      %p229 = pneg %p228
      // Predicated region
      $region37: #{tpu_custom_call.1} parent=5 // pred_check
        _
      $region38: #{tpu_custom_call.1} parent=5 // pred_check_branch
        %231 = sbr.rel (%p228) target = $region40
      $region39: #{tpu_custom_call.1} parent=5 // pred_region
        %s232 = ssub.s32 %s15, 1
        %s233 = sand.u32 %s28, 1
        %s234 = scalar_lea.sflag [#allocation3], %s233
        %s235 = sand.u32 %s28, 1
        %s236 = smul.addr %s235, 64
        %s237 = scalar_lea.vmem [#allocation2], %s236
        // Predicated region
        $region41: #{tpu_custom_call.1} parent=39 // pred_check
          %p238 = pneg %p41
        $region42: #{tpu_custom_call.1} parent=39 // pred_check_branch
          %240 = sbr.rel (%p238) target = $region44
        $region43: #{tpu_custom_call.1} parent=39 // pred_region
          %242 = dma.done %s234, 1024
        $region44: #{tpu_custom_call.1} parent=39 // pred_fallthru
          _
        // Predicated region
        $region45: #{tpu_custom_call.1} parent=39 // pred_check
          %p243 = pneg %p62
        $region46: #{tpu_custom_call.1} parent=39 // pred_check_branch
          %245 = sbr.rel (%p243) target = $region48
        $region47: #{tpu_custom_call.1} parent=39 // pred_region
          %247 = dma.done [#allocation5], 1024
        $region48: #{tpu_custom_call.1} parent=39 // pred_fallthru
          _
        // Predicated region
        $region49: #{tpu_custom_call.1} parent=39 // pred_check
          %p248 = pneg %p104
        $region50: #{tpu_custom_call.1} parent=39 // pred_check_branch
          %250 = sbr.rel (%p248) target = $region52
        $region51: #{tpu_custom_call.1} parent=39 // pred_region
          %252 = dma.done [#allocation5], 1024
        $region52: #{tpu_custom_call.1} parent=39 // pred_fallthru
          _
        %s253 = sand.u32 %s28, 1
        %s254 = scalar_lea.sflag [#allocation3], %s253
        %s255 = sand.u32 %s28, 1
        %s256 = smul.addr %s255, 64
        %s257 = scalar_lea.vmem [#allocation2], %s256
        %p258 = pneg %p41
        %p259 = pneg %p38
        %p260 = pneg %p62
        %p261 = pneg %p59
        %p262 = pneg %p83
        %p263 = pneg %p80
        %p264 = pneg %p104
        %p265 = pneg %p101
        %p266 = pneg %p125
        %p267 = pneg %p122
        %p268 = pneg %p151
        %p269 = pneg %p148
        %s270 = smul.u32 16, %s20
        %p271 = scmp.lt.s32.totalorder %s270, 31
        %s272 = scalar_select %p271, %s270, 31
        %s273 = smul.addr %s272, 8
        %s274 = scalar_lea.vmem %s5, %s273
        %s275 = smul.u32 16, %s20
        %s276 = smul.u32 16, %s20
        %p277 = scmp.lt.s32.totalorder %s276, 31
        %s278 = scalar_select %p277, %s276, 31
        %s279 = smul.addr %s278, 8
        %s280 = scalar_lea.vmem %s5, %s279
        %s281 = smul.u32 16, %s20
        %v282 = vld [vmem:[%s237] sm:$0xf]
        %v283 = vld [vmem:[%s237 + $0x4] sm:$0xf]
        %v284 = vld [vmem:[%s237 + $0x8] sm:$0xf]
        %v285 = vld [vmem:[%s237 + $0xc] sm:$0xf]
        %v286 = vld [vmem:[%s237 + $0x10] sm:$0xf]
        %v287 = vld [vmem:[%s237 + $0x14] sm:$0xf]
        %v288 = vld [vmem:[%s237 + $0x18] sm:$0xf]
        %v289 = vld [vmem:[%s237 + $0x1c] sm:$0xf]
        %v290 = vld [vmem:[%s237 + $0x20] sm:$0xf]
        %v291 = vld [vmem:[%s237 + $0x24] sm:$0xf]
        %v292 = vld [vmem:[%s237 + $0x28] sm:$0xf]
        %v293 = vld [vmem:[%s237 + $0x2c] sm:$0xf]
        %v294 = vld [vmem:[%s237 + $0x30] sm:$0xf]
        %v295 = vld [vmem:[%s237 + $0x34] sm:$0xf]
        %v296 = vld [vmem:[%s237 + $0x38] sm:$0xf]
        %v297 = vld [vmem:[%s237 + $0x3c] sm:$0xf]
        %v298 = vld [vmem:[#allocation4] sm:$0xf]
        %v299 = vld [vmem:[#allocation4 + $0x4] sm:$0xf]
        %v300 = vld [vmem:[#allocation4 + $0x8] sm:$0xf]
        %v301 = vld [vmem:[#allocation4 + $0xc] sm:$0xf]
        %v302 = vld [vmem:[#allocation4 + $0x10] sm:$0xf]
        %v303 = vld [vmem:[#allocation4 + $0x14] sm:$0xf]
        %v304 = vld [vmem:[#allocation4 + $0x18] sm:$0xf]
        %v305 = vld [vmem:[#allocation4 + $0x1c] sm:$0xf]
        %v306 = vld [vmem:[#allocation4 + $0x20] sm:$0xf]
        %v307 = vld [vmem:[#allocation4 + $0x24] sm:$0xf]
        %v308 = vld [vmem:[#allocation4 + $0x28] sm:$0xf]
        %v309 = vld [vmem:[#allocation4 + $0x2c] sm:$0xf]
        %v310 = vld [vmem:[#allocation4 + $0x30] sm:$0xf]
        %v311 = vld [vmem:[#allocation4 + $0x34] sm:$0xf]
        %v312 = vld [vmem:[#allocation4 + $0x38] sm:$0xf]
        %v313 = vld [vmem:[#allocation4 + $0x3c] sm:$0xf]
        %v314 = vld [vmem:[%s2] sm:$0x1]
        %v316 = vperm.slane %v314, 0
        %v334 = vunpack.c.l.b16 %v282
        %v335 = vunpack.c.l.b16 %v283
        %v336 = vunpack.c.l.b16 %v284
        %v337 = vunpack.c.l.b16 %v285
        %v338 = vunpack.c.l.b16 %v286
        %v339 = vunpack.c.l.b16 %v287
        %v340 = vunpack.c.l.b16 %v288
        %v341 = vunpack.c.l.b16 %v289
        %v342 = vunpack.c.l.b16 %v290
        %v343 = vunpack.c.l.b16 %v291
        %v344 = vunpack.c.l.b16 %v292
        %v345 = vunpack.c.l.b16 %v293
        %v346 = vunpack.c.l.b16 %v294
        %v347 = vunpack.c.l.b16 %v295
        %v348 = vunpack.c.l.b16 %v296
        %v349 = vunpack.c.l.b16 %v297
        %v350 = vpack.c.b16 %v335, %v334
        %v351 = vpack.c.b16 %v337, %v336
        %v352 = vpack.c.b16 %v339, %v338
        %v353 = vpack.c.b16 %v341, %v340
        %v354 = vpack.c.b16 %v343, %v342
        %v355 = vpack.c.b16 %v345, %v344
        %v356 = vpack.c.b16 %v347, %v346
        %v357 = vpack.c.b16 %v349, %v348
        %v382 = vunpack.c.l.b16 %v298
        %v383 = vunpack.c.l.b16 %v299
        %v384 = vunpack.c.l.b16 %v300
        %v385 = vunpack.c.l.b16 %v301
        %v386 = vunpack.c.l.b16 %v302
        %v387 = vunpack.c.l.b16 %v303
        %v388 = vunpack.c.l.b16 %v304
        %v389 = vunpack.c.l.b16 %v305
        %v390 = vunpack.c.l.b16 %v306
        %v391 = vunpack.c.l.b16 %v307
        %v392 = vunpack.c.l.b16 %v308
        %v393 = vunpack.c.l.b16 %v309
        %v394 = vunpack.c.l.b16 %v310
        %v395 = vunpack.c.l.b16 %v311
        %v396 = vunpack.c.l.b16 %v312
        %v397 = vunpack.c.l.b16 %v313
        %v398 = vpack.c.b16 %v383, %v382
        %v399 = vpack.c.b16 %v385, %v384
        %v400 = vpack.c.b16 %v387, %v386
        %v401 = vpack.c.b16 %v389, %v388
        %v402 = vpack.c.b16 %v391, %v390
        %v403 = vpack.c.b16 %v393, %v392
        %v404 = vpack.c.b16 %v395, %v394
        %v405 = vpack.c.b16 %v397, %v396
        %414 = vmatpush.bf16.msra.mxu0 %v405
        %415 = vmatpush.bf16.msra.mxu0 %v404
        %416 = vmatpush.bf16.msra.mxu0 %v403
        %417 = vmatpush.bf16.msra.mxu0 %v402
        %418 = vmatpush.bf16.msra.mxu0 %v401
        %419 = vmatpush.bf16.msra.mxu0 %v400
        %420 = vmatpush.bf16.msra.mxu0 %v399
        %421 = vmatpush.bf16.msra.mxu0 %v398
        %422 = vmatmul.bf16.gmra.mxu0 %v350
        %v423 = vpop.f32.mrf.mxu0
        %v424 = vadd.f32 %v316, %v423
        %v425 = vpop.f32.mrf.mxu0
        %v426 = vadd.f32 %v316, %v425
        %427 = vmatmul.bf16.gmra.mxu0 %v351
        %v428 = vpop.f32.mrf.mxu0
        %v429 = vadd.f32 %v316, %v428
        %v430 = vpop.f32.mrf.mxu0
        %v431 = vadd.f32 %v316, %v430
        %432 = vmatmul.bf16.gmra.mxu0 %v352
        %v433 = vpop.f32.mrf.mxu0
        %v434 = vadd.f32 %v316, %v433
        %v435 = vpop.f32.mrf.mxu0
        %v436 = vadd.f32 %v316, %v435
        %437 = vmatmul.bf16.gmra.mxu0 %v353
        %v438 = vpop.f32.mrf.mxu0
        %v439 = vadd.f32 %v316, %v438
        %v440 = vpop.f32.mrf.mxu0
        %v441 = vadd.f32 %v316, %v440
        %442 = vmatmul.bf16.gmra.mxu0 %v354
        %v443 = vpop.f32.mrf.mxu0
        %v444 = vadd.f32 %v316, %v443
        %v445 = vpop.f32.mrf.mxu0
        %v446 = vadd.f32 %v316, %v445
        %447 = vmatmul.bf16.gmra.mxu0 %v355
        %v448 = vpop.f32.mrf.mxu0
        %v449 = vadd.f32 %v316, %v448
        %v450 = vpop.f32.mrf.mxu0
        %v451 = vadd.f32 %v316, %v450
        %452 = vmatmul.bf16.gmra.mxu0 %v356
        %v453 = vpop.f32.mrf.mxu0
        %v454 = vadd.f32 %v316, %v453
        %v455 = vpop.f32.mrf.mxu0
        %v456 = vadd.f32 %v316, %v455
        %457 = vmatmul.bf16.gmra.mxu0 %v357
        %v458 = vpop.f32.mrf.mxu0
        %v459 = vadd.f32 %v316, %v458
        %v460 = vpop.f32.mrf.mxu0
        %v461 = vadd.f32 %v316, %v460
        %462 = vdwg.mxu0
        %v463 = vmax.f32 %v424, 0.0
        %v464 = vmax.f32 %v426, 0.0
        %v465 = vmax.f32 %v429, 0.0
        %v466 = vmax.f32 %v431, 0.0
        %v467 = vmax.f32 %v434, 0.0
        %v468 = vmax.f32 %v436, 0.0
        %v469 = vmax.f32 %v439, 0.0
        %v470 = vmax.f32 %v441, 0.0
        %v471 = vmax.f32 %v444, 0.0
        %v472 = vmax.f32 %v446, 0.0
        %v473 = vmax.f32 %v449, 0.0
        %v474 = vmax.f32 %v451, 0.0
        %v475 = vmax.f32 %v454, 0.0
        %v476 = vmax.f32 %v456, 0.0
        %v477 = vmax.f32 %v459, 0.0
        %v478 = vmax.f32 %v461, 0.0
        %v479 = vpack.c.bf16 %v464, %v463
        %v480 = vpack.c.bf16 %v466, %v465
        %v481 = vpack.c.bf16 %v468, %v467
        %v482 = vpack.c.bf16 %v470, %v469
        %v483 = vpack.c.bf16 %v472, %v471
        %v484 = vpack.c.bf16 %v474, %v473
        %v485 = vpack.c.bf16 %v476, %v475
        %v486 = vpack.c.bf16 %v478, %v477
        %v487 = vld [vmem:[#allocation6] sm:$0xf]
        %v488 = vld [vmem:[#allocation6 + $0x4] sm:$0xf]
        %v489 = vld [vmem:[#allocation6 + $0x8] sm:$0xf]
        %v490 = vld [vmem:[#allocation6 + $0xc] sm:$0xf]
        %v491 = vld [vmem:[#allocation6 + $0x10] sm:$0xf]
        %v492 = vld [vmem:[#allocation6 + $0x14] sm:$0xf]
        %v493 = vld [vmem:[#allocation6 + $0x18] sm:$0xf]
        %v494 = vld [vmem:[#allocation6 + $0x1c] sm:$0xf]
        %v495 = vld [vmem:[#allocation6 + $0x20] sm:$0xf]
        %v496 = vld [vmem:[#allocation6 + $0x24] sm:$0xf]
        %v497 = vld [vmem:[#allocation6 + $0x28] sm:$0xf]
        %v498 = vld [vmem:[#allocation6 + $0x2c] sm:$0xf]
        %v499 = vld [vmem:[#allocation6 + $0x30] sm:$0xf]
        %v500 = vld [vmem:[#allocation6 + $0x34] sm:$0xf]
        %v501 = vld [vmem:[#allocation6 + $0x38] sm:$0xf]
        %v502 = vld [vmem:[#allocation6 + $0x3c] sm:$0xf]
        %v503 = vld [vmem:[%s4] sm:$0x1]
        %v505 = vperm.slane %v503, 0
        %v523 = vunpack.c.l.b16 %v487
        %v524 = vunpack.c.l.b16 %v488
        %v525 = vunpack.c.l.b16 %v489
        %v526 = vunpack.c.l.b16 %v490
        %v527 = vunpack.c.l.b16 %v491
        %v528 = vunpack.c.l.b16 %v492
        %v529 = vunpack.c.l.b16 %v493
        %v530 = vunpack.c.l.b16 %v494
        %v531 = vunpack.c.l.b16 %v495
        %v532 = vunpack.c.l.b16 %v496
        %v533 = vunpack.c.l.b16 %v497
        %v534 = vunpack.c.l.b16 %v498
        %v535 = vunpack.c.l.b16 %v499
        %v536 = vunpack.c.l.b16 %v500
        %v537 = vunpack.c.l.b16 %v501
        %v538 = vunpack.c.l.b16 %v502
        %v539 = vpack.c.b16 %v524, %v523
        %v540 = vpack.c.b16 %v526, %v525
        %v541 = vpack.c.b16 %v528, %v527
        %v542 = vpack.c.b16 %v530, %v529
        %v543 = vpack.c.b16 %v532, %v531
        %v544 = vpack.c.b16 %v534, %v533
        %v545 = vpack.c.b16 %v536, %v535
        %v546 = vpack.c.b16 %v538, %v537
        %555 = vmatpush.bf16.msra.mxu0 %v546
        %556 = vmatpush.bf16.msra.mxu0 %v545
        %557 = vmatpush.bf16.msra.mxu0 %v544
        %558 = vmatpush.bf16.msra.mxu0 %v543
        %559 = vmatpush.bf16.msra.mxu0 %v542
        %560 = vmatpush.bf16.msra.mxu0 %v541
        %561 = vmatpush.bf16.msra.mxu0 %v540
        %562 = vmatpush.bf16.msra.mxu0 %v539
        %563 = vmatmul.bf16.gmra.mxu0 %v479
        %v564 = vpop.f32.mrf.mxu0
        %v565 = vadd.f32 %v505, %v564
        %v566 = vpop.f32.mrf.mxu0
        %v567 = vadd.f32 %v505, %v566
        %568 = vmatmul.bf16.gmra.mxu0 %v480
        %v569 = vpop.f32.mrf.mxu0
        %v570 = vadd.f32 %v505, %v569
        %v571 = vpop.f32.mrf.mxu0
        %v572 = vadd.f32 %v505, %v571
        %573 = vmatmul.bf16.gmra.mxu0 %v481
        %v574 = vpop.f32.mrf.mxu0
        %v575 = vadd.f32 %v505, %v574
        %v576 = vpop.f32.mrf.mxu0
        %v577 = vadd.f32 %v505, %v576
        %578 = vmatmul.bf16.gmra.mxu0 %v482
        %v579 = vpop.f32.mrf.mxu0
        %v580 = vadd.f32 %v505, %v579
        %v581 = vpop.f32.mrf.mxu0
        %v582 = vadd.f32 %v505, %v581
        %583 = vmatmul.bf16.gmra.mxu0 %v483
        %v584 = vpop.f32.mrf.mxu0
        %v585 = vadd.f32 %v505, %v584
        %v586 = vpop.f32.mrf.mxu0
        %v587 = vadd.f32 %v505, %v586
        %588 = vmatmul.bf16.gmra.mxu0 %v484
        %v589 = vpop.f32.mrf.mxu0
        %v590 = vadd.f32 %v505, %v589
        %v591 = vpop.f32.mrf.mxu0
        %v592 = vadd.f32 %v505, %v591
        %593 = vmatmul.bf16.gmra.mxu0 %v485
        %v594 = vpop.f32.mrf.mxu0
        %v595 = vadd.f32 %v505, %v594
        %v596 = vpop.f32.mrf.mxu0
        %v597 = vadd.f32 %v505, %v596
        %598 = vmatmul.bf16.gmra.mxu0 %v486
        %v599 = vpop.f32.mrf.mxu0
        %v600 = vadd.f32 %v505, %v599
        %v601 = vpop.f32.mrf.mxu0
        %v602 = vadd.f32 %v505, %v601
        %603 = vdwg.mxu0
        %604 = vmax.xlane.f32.xlu0 %v565
        %v605 = vpop.xlane.xlu0 %604
        %606 = vmax.xlane.f32.xlu0 %v567
        %v607 = vpop.xlane.xlu0 %606
        %608 = vmax.xlane.f32.xlu0 %v570
        %v609 = vpop.xlane.xlu0 %608
        %610 = vmax.xlane.f32.xlu0 %v572
        %v611 = vpop.xlane.xlu0 %610
        %612 = vmax.xlane.f32.xlu0 %v575
        %v613 = vpop.xlane.xlu0 %612
        %614 = vmax.xlane.f32.xlu0 %v577
        %v615 = vpop.xlane.xlu0 %614
        %616 = vmax.xlane.f32.xlu0 %v580
        %v617 = vpop.xlane.xlu0 %616
        %618 = vmax.xlane.f32.xlu0 %v582
        %v619 = vpop.xlane.xlu0 %618
        %620 = vmax.xlane.f32.xlu0 %v585
        %v621 = vpop.xlane.xlu0 %620
        %622 = vmax.xlane.f32.xlu0 %v587
        %v623 = vpop.xlane.xlu0 %622
        %624 = vmax.xlane.f32.xlu0 %v590
        %v625 = vpop.xlane.xlu0 %624
        %626 = vmax.xlane.f32.xlu0 %v592
        %v627 = vpop.xlane.xlu0 %626
        %628 = vmax.xlane.f32.xlu0 %v595
        %v629 = vpop.xlane.xlu0 %628
        %630 = vmax.xlane.f32.xlu0 %v597
        %v631 = vpop.xlane.xlu0 %630
        %632 = vmax.xlane.f32.xlu0 %v600
        %v633 = vpop.xlane.xlu0 %632
        %634 = vmax.xlane.f32.xlu0 %v602
        %v635 = vpop.xlane.xlu0 %634
        %v636 = vsub.f32 %v565, %v605
        %v637 = vsub.f32 %v567, %v607
        %v638 = vsub.f32 %v570, %v609
        %v639 = vsub.f32 %v572, %v611
        %v640 = vsub.f32 %v575, %v613
        %v641 = vsub.f32 %v577, %v615
        %v642 = vsub.f32 %v580, %v617
        %v643 = vsub.f32 %v582, %v619
        %v644 = vsub.f32 %v585, %v621
        %v645 = vsub.f32 %v587, %v623
        %v646 = vsub.f32 %v590, %v625
        %v647 = vsub.f32 %v592, %v627
        %v648 = vsub.f32 %v595, %v629
        %v649 = vsub.f32 %v597, %v631
        %v650 = vsub.f32 %v600, %v633
        %v651 = vsub.f32 %v602, %v635
        %v652 = vmul.f32 %v636, 1.442695
        %v653 = vpow.pop %v652
        %v654 = vmul.f32 %v637, 1.442695
        %v655 = vpow.pop %v654
        %v656 = vmul.f32 %v638, 1.442695
        %v657 = vpow.pop %v656
        %v658 = vmul.f32 %v639, 1.442695
        %v659 = vpow.pop %v658
        %v660 = vmul.f32 %v640, 1.442695
        %v661 = vpow.pop %v660
        %v662 = vmul.f32 %v641, 1.442695
        %v663 = vpow.pop %v662
        %v664 = vmul.f32 %v642, 1.442695
        %v665 = vpow.pop %v664
        %v666 = vmul.f32 %v643, 1.442695
        %v667 = vpow.pop %v666
        %v668 = vmul.f32 %v644, 1.442695
        %v669 = vpow.pop %v668
        %v670 = vmul.f32 %v645, 1.442695
        %v671 = vpow.pop %v670
        %v672 = vmul.f32 %v646, 1.442695
        %v673 = vpow.pop %v672
        %v674 = vmul.f32 %v647, 1.442695
        %v675 = vpow.pop %v674
        %v676 = vmul.f32 %v648, 1.442695
        %v677 = vpow.pop %v676
        %v678 = vmul.f32 %v649, 1.442695
        %v679 = vpow.pop %v678
        %v680 = vmul.f32 %v650, 1.442695
        %v681 = vpow.pop %v680
        %v682 = vmul.f32 %v651, 1.442695
        %v683 = vpow.pop %v682
        %684 = vadd.xlane.f32.xlu0 %v653
        %v685 = vpop.xlane.xlu0 %684
        %686 = vadd.xlane.f32.xlu0 %v655
        %v687 = vpop.xlane.xlu0 %686
        %688 = vadd.xlane.f32.xlu0 %v657
        %v689 = vpop.xlane.xlu0 %688
        %690 = vadd.xlane.f32.xlu0 %v659
        %v691 = vpop.xlane.xlu0 %690
        %692 = vadd.xlane.f32.xlu0 %v661
        %v693 = vpop.xlane.xlu0 %692
        %694 = vadd.xlane.f32.xlu0 %v663
        %v695 = vpop.xlane.xlu0 %694
        %696 = vadd.xlane.f32.xlu0 %v665
        %v697 = vpop.xlane.xlu0 %696
        %698 = vadd.xlane.f32.xlu0 %v667
        %v699 = vpop.xlane.xlu0 %698
        %700 = vadd.xlane.f32.xlu0 %v669
        %v701 = vpop.xlane.xlu0 %700
        %702 = vadd.xlane.f32.xlu0 %v671
        %v703 = vpop.xlane.xlu0 %702
        %704 = vadd.xlane.f32.xlu0 %v673
        %v705 = vpop.xlane.xlu0 %704
        %706 = vadd.xlane.f32.xlu0 %v675
        %v707 = vpop.xlane.xlu0 %706
        %708 = vadd.xlane.f32.xlu0 %v677
        %v709 = vpop.xlane.xlu0 %708
        %710 = vadd.xlane.f32.xlu0 %v679
        %v711 = vpop.xlane.xlu0 %710
        %712 = vadd.xlane.f32.xlu0 %v681
        %v713 = vpop.xlane.xlu0 %712
        %714 = vadd.xlane.f32.xlu0 %v683
        %v715 = vpop.xlane.xlu0 %714
        %v716 = vrcp.pop %v685
        %v717 = vmul.f32 %v685, %v716
        %v718 = vsub.f32 1.0, %v717
        %v719 = vmul.f32 %v716, %v718
        %v720 = vadd.f32 %v716, %v719
        %vm721 = vweird.f32 %v685
        %vm722 = vweird.f32 %v716
        %vm723 = vmor %vm721, %vm722
        %v724 = vsel %vm723, %v716, %v720
        %v725 = vand.u32 2147483647, %v685
        %vm726 = vcmp.eq.f32.partialorder %v725, 8.507059e+37
        %v727 = vand.u32 %v685, 2147483648
        %v728 = vor.u32 1.1754944e-38, %v727
        %v729 = vsel %vm726, %v728, %v724
        %v730 = vmul.f32 %v653, %v729
        %v731 = vrcp.pop %v687
        %v732 = vmul.f32 %v687, %v731
        %v733 = vsub.f32 1.0, %v732
        %v734 = vmul.f32 %v731, %v733
        %v735 = vadd.f32 %v731, %v734
        %vm736 = vweird.f32 %v687
        %vm737 = vweird.f32 %v731
        %vm738 = vmor %vm736, %vm737
        %v739 = vsel %vm738, %v731, %v735
        %v740 = vand.u32 2147483647, %v687
        %vm741 = vcmp.eq.f32.partialorder %v740, 8.507059e+37
        %v742 = vand.u32 %v687, 2147483648
        %v743 = vor.u32 1.1754944e-38, %v742
        %v744 = vsel %vm741, %v743, %v739
        %v745 = vmul.f32 %v655, %v744
        %v746 = vrcp.pop %v689
        %v747 = vmul.f32 %v689, %v746
        %v748 = vsub.f32 1.0, %v747
        %v749 = vmul.f32 %v746, %v748
        %v750 = vadd.f32 %v746, %v749
        %vm751 = vweird.f32 %v689
        %vm752 = vweird.f32 %v746
        %vm753 = vmor %vm751, %vm752
        %v754 = vsel %vm753, %v746, %v750
        %v755 = vand.u32 2147483647, %v689
        %vm756 = vcmp.eq.f32.partialorder %v755, 8.507059e+37
        %v757 = vand.u32 %v689, 2147483648
        %v758 = vor.u32 1.1754944e-38, %v757
        %v759 = vsel %vm756, %v758, %v754
        %v760 = vmul.f32 %v657, %v759
        %v761 = vrcp.pop %v691
        %v762 = vmul.f32 %v691, %v761
        %v763 = vsub.f32 1.0, %v762
        %v764 = vmul.f32 %v761, %v763
        %v765 = vadd.f32 %v761, %v764
        %vm766 = vweird.f32 %v691
        %vm767 = vweird.f32 %v761
        %vm768 = vmor %vm766, %vm767
        %v769 = vsel %vm768, %v761, %v765
        %v770 = vand.u32 2147483647, %v691
        %vm771 = vcmp.eq.f32.partialorder %v770, 8.507059e+37
        %v772 = vand.u32 %v691, 2147483648
        %v773 = vor.u32 1.1754944e-38, %v772
        %v774 = vsel %vm771, %v773, %v769
        %v775 = vmul.f32 %v659, %v774
        %v776 = vrcp.pop %v693
        %v777 = vmul.f32 %v693, %v776
        %v778 = vsub.f32 1.0, %v777
        %v779 = vmul.f32 %v776, %v778
        %v780 = vadd.f32 %v776, %v779
        %vm781 = vweird.f32 %v693
        %vm782 = vweird.f32 %v776
        %vm783 = vmor %vm781, %vm782
        %v784 = vsel %vm783, %v776, %v780
        %v785 = vand.u32 2147483647, %v693
        %vm786 = vcmp.eq.f32.partialorder %v785, 8.507059e+37
        %v787 = vand.u32 %v693, 2147483648
        %v788 = vor.u32 1.1754944e-38, %v787
        %v789 = vsel %vm786, %v788, %v784
        %v790 = vmul.f32 %v661, %v789
        %v791 = vrcp.pop %v695
        %v792 = vmul.f32 %v695, %v791
        %v793 = vsub.f32 1.0, %v792
        %v794 = vmul.f32 %v791, %v793
        %v795 = vadd.f32 %v791, %v794
        %vm796 = vweird.f32 %v695
        %vm797 = vweird.f32 %v791
        %vm798 = vmor %vm796, %vm797
        %v799 = vsel %vm798, %v791, %v795
        %v800 = vand.u32 2147483647, %v695
        %vm801 = vcmp.eq.f32.partialorder %v800, 8.507059e+37
        %v802 = vand.u32 %v695, 2147483648
        %v803 = vor.u32 1.1754944e-38, %v802
        %v804 = vsel %vm801, %v803, %v799
        %v805 = vmul.f32 %v663, %v804
        %v806 = vrcp.pop %v697
        %v807 = vmul.f32 %v697, %v806
        %v808 = vsub.f32 1.0, %v807
        %v809 = vmul.f32 %v806, %v808
        %v810 = vadd.f32 %v806, %v809
        %vm811 = vweird.f32 %v697
        %vm812 = vweird.f32 %v806
        %vm813 = vmor %vm811, %vm812
        %v814 = vsel %vm813, %v806, %v810
        %v815 = vand.u32 2147483647, %v697
        %vm816 = vcmp.eq.f32.partialorder %v815, 8.507059e+37
        %v817 = vand.u32 %v697, 2147483648
        %v818 = vor.u32 1.1754944e-38, %v817
        %v819 = vsel %vm816, %v818, %v814
        %v820 = vmul.f32 %v665, %v819
        %v821 = vrcp.pop %v699
        %v822 = vmul.f32 %v699, %v821
        %v823 = vsub.f32 1.0, %v822
        %v824 = vmul.f32 %v821, %v823
        %v825 = vadd.f32 %v821, %v824
        %vm826 = vweird.f32 %v699
        %vm827 = vweird.f32 %v821
        %vm828 = vmor %vm826, %vm827
        %v829 = vsel %vm828, %v821, %v825
        %v830 = vand.u32 2147483647, %v699
        %vm831 = vcmp.eq.f32.partialorder %v830, 8.507059e+37
        %v832 = vand.u32 %v699, 2147483648
        %v833 = vor.u32 1.1754944e-38, %v832
        %v834 = vsel %vm831, %v833, %v829
        %v835 = vmul.f32 %v667, %v834
        %v836 = vrcp.pop %v701
        %v837 = vmul.f32 %v701, %v836
        %v838 = vsub.f32 1.0, %v837
        %v839 = vmul.f32 %v836, %v838
        %v840 = vadd.f32 %v836, %v839
        %vm841 = vweird.f32 %v701
        %vm842 = vweird.f32 %v836
        %vm843 = vmor %vm841, %vm842
        %v844 = vsel %vm843, %v836, %v840
        %v845 = vand.u32 2147483647, %v701
        %vm846 = vcmp.eq.f32.partialorder %v845, 8.507059e+37
        %v847 = vand.u32 %v701, 2147483648
        %v848 = vor.u32 1.1754944e-38, %v847
        %v849 = vsel %vm846, %v848, %v844
        %v850 = vmul.f32 %v669, %v849
        %v851 = vrcp.pop %v703
        %v852 = vmul.f32 %v703, %v851
        %v853 = vsub.f32 1.0, %v852
        %v854 = vmul.f32 %v851, %v853
        %v855 = vadd.f32 %v851, %v854
        %vm856 = vweird.f32 %v703
        %vm857 = vweird.f32 %v851
        %vm858 = vmor %vm856, %vm857
        %v859 = vsel %vm858, %v851, %v855
        %v860 = vand.u32 2147483647, %v703
        %vm861 = vcmp.eq.f32.partialorder %v860, 8.507059e+37
        %v862 = vand.u32 %v703, 2147483648
        %v863 = vor.u32 1.1754944e-38, %v862
        %v864 = vsel %vm861, %v863, %v859
        %v865 = vmul.f32 %v671, %v864
        %v866 = vrcp.pop %v705
        %v867 = vmul.f32 %v705, %v866
        %v868 = vsub.f32 1.0, %v867
        %v869 = vmul.f32 %v866, %v868
        %v870 = vadd.f32 %v866, %v869
        %vm871 = vweird.f32 %v705
        %vm872 = vweird.f32 %v866
        %vm873 = vmor %vm871, %vm872
        %v874 = vsel %vm873, %v866, %v870
        %v875 = vand.u32 2147483647, %v705
        %vm876 = vcmp.eq.f32.partialorder %v875, 8.507059e+37
        %v877 = vand.u32 %v705, 2147483648
        %v878 = vor.u32 1.1754944e-38, %v877
        %v879 = vsel %vm876, %v878, %v874
        %v880 = vmul.f32 %v673, %v879
        %v881 = vrcp.pop %v707
        %v882 = vmul.f32 %v707, %v881
        %v883 = vsub.f32 1.0, %v882
        %v884 = vmul.f32 %v881, %v883
        %v885 = vadd.f32 %v881, %v884
        %vm886 = vweird.f32 %v707
        %vm887 = vweird.f32 %v881
        %vm888 = vmor %vm886, %vm887
        %v889 = vsel %vm888, %v881, %v885
        %v890 = vand.u32 2147483647, %v707
        %vm891 = vcmp.eq.f32.partialorder %v890, 8.507059e+37
        %v892 = vand.u32 %v707, 2147483648
        %v893 = vor.u32 1.1754944e-38, %v892
        %v894 = vsel %vm891, %v893, %v889
        %v895 = vmul.f32 %v675, %v894
        %v896 = vrcp.pop %v709
        %v897 = vmul.f32 %v709, %v896
        %v898 = vsub.f32 1.0, %v897
        %v899 = vmul.f32 %v896, %v898
        %v900 = vadd.f32 %v896, %v899
        %vm901 = vweird.f32 %v709
        %vm902 = vweird.f32 %v896
        %vm903 = vmor %vm901, %vm902
        %v904 = vsel %vm903, %v896, %v900
        %v905 = vand.u32 2147483647, %v709
        %vm906 = vcmp.eq.f32.partialorder %v905, 8.507059e+37
        %v907 = vand.u32 %v709, 2147483648
        %v908 = vor.u32 1.1754944e-38, %v907
        %v909 = vsel %vm906, %v908, %v904
        %v910 = vmul.f32 %v677, %v909
        %v911 = vrcp.pop %v711
        %v912 = vmul.f32 %v711, %v911
        %v913 = vsub.f32 1.0, %v912
        %v914 = vmul.f32 %v911, %v913
        %v915 = vadd.f32 %v911, %v914
        %vm916 = vweird.f32 %v711
        %vm917 = vweird.f32 %v911
        %vm918 = vmor %vm916, %vm917
        %v919 = vsel %vm918, %v911, %v915
        %v920 = vand.u32 2147483647, %v711
        %vm921 = vcmp.eq.f32.partialorder %v920, 8.507059e+37
        %v922 = vand.u32 %v711, 2147483648
        %v923 = vor.u32 1.1754944e-38, %v922
        %v924 = vsel %vm921, %v923, %v919
        %v925 = vmul.f32 %v679, %v924
        %v926 = vrcp.pop %v713
        %v927 = vmul.f32 %v713, %v926
        %v928 = vsub.f32 1.0, %v927
        %v929 = vmul.f32 %v926, %v928
        %v930 = vadd.f32 %v926, %v929
        %vm931 = vweird.f32 %v713
        %vm932 = vweird.f32 %v926
        %vm933 = vmor %vm931, %vm932
        %v934 = vsel %vm933, %v926, %v930
        %v935 = vand.u32 2147483647, %v713
        %vm936 = vcmp.eq.f32.partialorder %v935, 8.507059e+37
        %v937 = vand.u32 %v713, 2147483648
        %v938 = vor.u32 1.1754944e-38, %v937
        %v939 = vsel %vm936, %v938, %v934
        %v940 = vmul.f32 %v681, %v939
        %v941 = vrcp.pop %v715
        %v942 = vmul.f32 %v715, %v941
        %v943 = vsub.f32 1.0, %v942
        %v944 = vmul.f32 %v941, %v943
        %v945 = vadd.f32 %v941, %v944
        %vm946 = vweird.f32 %v715
        %vm947 = vweird.f32 %v941
        %vm948 = vmor %vm946, %vm947
        %v949 = vsel %vm948, %v941, %v945
        %v950 = vand.u32 2147483647, %v715
        %vm951 = vcmp.eq.f32.partialorder %v950, 8.507059e+37
        %v952 = vand.u32 %v715, 2147483648
        %v953 = vor.u32 1.1754944e-38, %v952
        %v954 = vsel %vm951, %v953, %v949
        %v955 = vmul.f32 %v683, %v954
        %vm956 = vcmask 31744
        %957 = vst.msk [vmem:[%s280] sm:$0xff] %vm956, %v730
        %958 = vst.msk [vmem:[%s280 + $0x8] sm:$0xff] %vm956, %v745
        %959 = vst.msk [vmem:[%s280 + $0x10] sm:$0xff] %vm956, %v760
        %960 = vst.msk [vmem:[%s280 + $0x18] sm:$0xff] %vm956, %v775
        %961 = vst.msk [vmem:[%s280 + $0x20] sm:$0xff] %vm956, %v790
        %962 = vst.msk [vmem:[%s280 + $0x28] sm:$0xff] %vm956, %v805
        %963 = vst.msk [vmem:[%s280 + $0x30] sm:$0xff] %vm956, %v820
        %964 = vst.msk [vmem:[%s280 + $0x38] sm:$0xff] %vm956, %v835
        %965 = vst.msk [vmem:[%s280 + $0x40] sm:$0xff] %vm956, %v850
        %966 = vst.msk [vmem:[%s280 + $0x48] sm:$0xff] %vm956, %v865
        %967 = vst.msk [vmem:[%s280 + $0x50] sm:$0xff] %vm956, %v880
        %968 = vst.msk [vmem:[%s280 + $0x58] sm:$0xff] %vm956, %v895
        %969 = vst.msk [vmem:[%s280 + $0x60] sm:$0xff] %vm956, %v910
        %970 = vst.msk [vmem:[%s280 + $0x68] sm:$0xff] %vm956, %v925
        %971 = vst.msk [vmem:[%s280 + $0x70] sm:$0xff] %vm956, %v940
        %972 = vst.msk [vmem:[%s280 + $0x78] sm:$0xff] %vm956, %v955
        %s973 = smul.u32 16, %s20
        %p974 = scmp.lt.s32.totalorder %s973, 31
        %s975 = scalar_select %p974, %s973, 31
        %s976 = smul.addr %s975, 8
        %s977 = scalar_lea.vmem %s5, %s976
        // Predicated region
        $region53: #{tpu_custom_call.1} parent=39 // pred_check
          %p978 = pneg %p148
        $region54: #{tpu_custom_call.1} parent=39 // pred_check_branch
          %980 = sbr.rel (%p978) target = $region56
        $region55: #{tpu_custom_call.1} parent=39 // pred_region
          %s981 = smul.u32 16, %s20
        $region56: #{tpu_custom_call.1} parent=39 // pred_fallthru
          _
      $region40: #{tpu_custom_call.1} parent=5 // pred_fallthru
        _
      %p982 = scmp.le.s32.totalorder 2, %s15
      // Predicated region
      $region57: #{tpu_custom_call.1} parent=5 // pred_check
        %p983 = pneg %p982
      $region58: #{tpu_custom_call.1} parent=5 // pred_check_branch
        %985 = sbr.rel (%p983) target = $region60
      $region59: #{tpu_custom_call.1} parent=5 // pred_region
        %s986 = ssub.s32 %s15, 2
        // Predicated region
        $region61: #{tpu_custom_call.1} parent=59 // pred_check
          %p987 = pneg %p154
        $region62: #{tpu_custom_call.1} parent=59 // pred_check_branch
          %989 = sbr.rel (%p987) target = $region64
        $region63: #{tpu_custom_call.1} parent=59 // pred_region
          %s990 = smul.u32 16, %s21
          %p991 = scmp.lt.s32.totalorder %s990, 31
          %s992 = scalar_select %p991, %s990, 31
          %s993 = smul.addr %s992, 8
          %s994 = scalar_lea.vmem %s5, %s993
        $region64: #{tpu_custom_call.1} parent=59 // pred_fallthru
          _
      $region60: #{tpu_custom_call.1} parent=5 // pred_fallthru
        _
    $region6: #{tpu_custom_call.1} parent=1 // loop_footer
      %s19 = sadd.s32 1, %s15
    $region7: #{tpu_custom_call.1} parent=1 // loop_footer_branch
      %14 = sbr.rel target = $region3
    $region8: #{tpu_custom_call.1} parent=1 // loop_exit
      _
    %995 = vsyncpa [#allocation3], 1
    %s996 = scalar_lea.sflag [#allocation3], 1
    %997 = vsyncpa %s996, 1
    %998 = vsyncpa [#allocation5], 1

</llo_original>
